<compile_context>
chip_gen: v7x
topology: tpu7x:2x2x1
jax: 0.10.0
libtpu: 0.0.40
codegen_flags: <defaults>
</compile_context>

<pallas_src>
import functools
import math

import jax
import jax.numpy as jnp
from jax import lax
from jax.experimental import pallas as pl
from jax.experimental.pallas import tpu as pltpu

_LANE = 128


def _round_up(v, m):
    return ((v + m - 1) // m) * m


def _vmem_budget():
    """Per-generation VMEM tile-sizing budget and scoped limit."""
    cap = 64 * 1024 * 1024  # safe default: v7x per-core VMEM
    try:
        cap = int(pltpu.get_tpu_info().vmem_capacity_bytes)
    except Exception:
        pass
    cap = max(cap, 16 * 1024 * 1024)
    budget = int(cap * 0.70)   # what the tile-size planner may spend
    limit = int(cap * 0.85)    # scoped VMEM limit requested from Mosaic
    return budget, limit


# --------------------------------------------------------------------------- #
# Kernel
# --------------------------------------------------------------------------- #
def mlp_kernel(x_ref, w1_ref, b1_ref, w2_ref, b2_ref, o_ref, acc_ref,
               *, tile_h, resident_weights, gelu_approximate):
    j = pl.program_id(1)

    @pl.when(j == 0)
    def _init():
        acc_ref[...] = jnp.zeros_like(acc_ref)

    # In-kernel cast (e.g. f32 -> bf16): avoids a separate wrapper-side HBM pass.
    x = x_ref[...].astype(w1_ref.dtype)

    if resident_weights:
        # Full weights are VMEM-resident; slice the current hidden chunk.
        off = pl.multiple_of(j * tile_h, _LANE)
        w1 = w1_ref[:, pl.ds(off, tile_h)]
        b1 = b1_ref[:, pl.ds(off, tile_h)]
        w2 = w2_ref[pl.ds(off, tile_h), :]
    else:
        # Weight chunks are streamed via the grid's hidden axis (BlockSpec DMA).
        w1 = w1_ref[...]
        b1 = b1_ref[...]
        w2 = w2_ref[...]

    # Linear 1 on the MXU (f32 accumulate), bias + GELU in f32.
    h = jnp.dot(x, w1, preferred_element_type=jnp.float32) + b1
    if gelu_approximate:
        h = jax.nn.gelu(h, approximate=True)          # tanh -> EUP (v6e/v7x option)
    else:
        # Exact erf-based GELU (matches torch nn.GELU() default).
        h = 0.5 * h * (1.0 + lax.erf(h * (1.0 / math.sqrt(2.0))))

    # TODO(synk): training-mode Dropout(p>0) would need pltpu.prng_seed /
    # pltpu.prng_random_bits here; eval / p=0.0 (the module default) is identity.

    # Linear 2 chunk contribution, accumulated in f32 VMEM scratch.
    acc_ref[...] += jnp.dot(h.astype(w2.dtype), w2,
                            preferred_element_type=jnp.float32)

    @pl.when(j == pl.num_programs(1) - 1)
    def _finalize():
        o_ref[...] = (acc_ref[...] + b2_ref[...]).astype(o_ref.dtype)


# --------------------------------------------------------------------------- #
# Tiling plan
# --------------------------------------------------------------------------- #
def _pick_tile_h(hidden_p, dim_p, w_bytes, budget, streamed):
    """Hidden-chunk width: multiple of 128 that exactly divides hidden_p."""
    if not streamed and hidden_p <= 1024:
        return hidden_p
    for t in (1024, 512, 256, 128):
        if t > hidden_p or hidden_p % t:
            continue
        if streamed and 2 * (2 * dim_p * t * w_bytes + 4 * t) > budget // 2:
            continue  # double-buffered weight chunk too large -> smaller chunk
        return t
    return 128  # hidden_p is always a multiple of 128


def _pick_tile_n(n, dim_p, tile_h, x_bytes, out_bytes, w_bytes,
                 weight_full_bytes, resident, budget, weight_buffers):
    """Largest row tile (multiple of 16) whose VMEM footprint fits the budget."""
    if n <= 16:
        return n  # full-extent row block
    if resident:
        fixed = weight_buffers * weight_full_bytes
    else:
        # Streamed per-chunk weights (double-buffered) + resident b2.
        fixed = 2 * (2 * dim_p * tile_h * w_bytes + 4 * tile_h) + 4 * dim_p
    for t in (2048, 1024, 512, 256, 128, 64, 32, 16):
        if t > n:
            continue
        per_tile = (2 * t * dim_p * x_bytes      # x tile (double-buffered)
                    + t * dim_p * 2              # in-kernel compute-dtype copy of x
                    + 2 * t * dim_p * out_bytes  # out tile (double-buffered)
                    + t * dim_p * 4              # f32 accumulator scratch
                    + t * tile_h * 6)            # f32 h chunk + bf16 copy
        if fixed + per_tile <= budget:
            return t
    return 16


def _plan(n, dim_p, hidden_p, x_bytes, out_bytes, w_bytes, budget, weight_buffers):
    weight_full = 2 * dim_p * hidden_p * w_bytes + (hidden_p + dim_p) * 4
    resident = weight_buffers * weight_full <= int(budget * 0.6)
    tile_h = _pick_tile_h(hidden_p, dim_p, w_bytes, budget, streamed=not resident)
    tile_n = _pick_tile_n(n, dim_p, tile_h, x_bytes, out_bytes, w_bytes,
                          weight_full, resident, budget, weight_buffers)
    # v7x megacore: prefer >= 2 independent row tiles so both TensorCores work.
    if n >= 32 and tile_n >= n:
        tile_n = min(tile_n, _round_up((n + 1) // 2, 16))
    grid = (pl.cdiv(n, tile_n), hidden_p // tile_h)
    return resident, tile_h, tile_n, grid


# --------------------------------------------------------------------------- #
# pallas_call builder + wrapper
# --------------------------------------------------------------------------- #
def _mlp_pallas_call(x2d, w1, b1, w2, b2, *, out_dtype, resident, tile_h, tile_n,
                     grid, vmem_limit, gelu_approximate, single_buffer_weights):
    n, dim_p = x2d.shape
    hidden_p = w1.shape[1]

    def wspec(shape, imap, constant):
        # Constant-index blocks never re-fetch -> a single pipeline buffer is enough.
        if constant and single_buffer_weights:
            return pl.BlockSpec(shape, imap, pipeline_mode=pl.Buffered(1))
        return pl.BlockSpec(shape, imap)

    x_spec = pl.BlockSpec((tile_n, dim_p), lambda i, j: (i, 0))
    if resident:
        w1_spec = wspec((dim_p, hidden_p), lambda i, j: (0, 0), True)
        b1_spec = wspec((1, hidden_p), lambda i, j: (0, 0), True)
        w2_spec = wspec((hidden_p, dim_p), lambda i, j: (0, 0), True)
    else:
        w1_spec = wspec((dim_p, tile_h), lambda i, j: (0, j), False)
        b1_spec = wspec((1, tile_h), lambda i, j: (0, j), False)
        w2_spec = wspec((tile_h, dim_p), lambda i, j: (j, 0), False)
    b2_spec = wspec((1, dim_p), lambda i, j: (0, 0), True)
    out_spec = pl.BlockSpec((tile_n, dim_p), lambda i, j: (i, 0))

    kernel = functools.partial(mlp_kernel, tile_h=tile_h,
                               resident_weights=resident,
                               gelu_approximate=gelu_approximate)

    return pl.pallas_call(
        kernel,
        out_shape=jax.ShapeDtypeStruct((n, dim_p), out_dtype),
        grid_spec=pltpu.PrefetchScalarGridSpec(
            num_scalar_prefetch=0,
            grid=grid,
            in_specs=[x_spec, w1_spec, b1_spec, w2_spec, b2_spec],
            out_specs=out_spec,
            scratch_shapes=[pltpu.VMEM((tile_n, dim_p), jnp.float32)],
        ),
        compiler_params=pltpu.CompilerParams(
            dimension_semantics=("parallel", "arbitrary"),
            vmem_limit_bytes=vmem_limit,
        ),
    )(x2d, w1, b1, w2, b2)


def prepare_mlp_params(w1, b1, w2, b2, *, compute_dtype=jnp.bfloat16):
    """One-time parameter prep (pad feature dims to 128, cast): hoisted out of
    the per-call hot path."""
    dim, hidden = w1.shape
    assert w2.shape == (hidden, dim) and b1.shape == (hidden,) and b2.shape == (dim,)
    dim_p = _round_up(dim, _LANE)
    hidden_p = _round_up(hidden, _LANE)
    if dim_p != dim or hidden_p != hidden:
        # Zero padding is a mathematical no-op: gelu(0 + 0) = 0, 0 * w2_pad = 0.
        w1 = jnp.pad(w1, ((0, dim_p - dim), (0, hidden_p - hidden)))
        w2 = jnp.pad(w2, ((0, hidden_p - hidden), (0, dim_p - dim)))
        b1 = jnp.pad(b1, (0, hidden_p - hidden))
        b2 = jnp.pad(b2, (0, dim_p - dim))
    return {
        "w1": w1.astype(compute_dtype),
        "b1": b1.reshape(1, hidden_p).astype(jnp.float32),
        "w2": w2.astype(compute_dtype),
        "b2": b2.reshape(1, dim_p).astype(jnp.float32),
        "dim": dim,
        "hidden": hidden,
    }


def simple_mlp(x, params, *, out_dtype=None, gelu_approximate=False):
    """x: (batch, seq, dim). params: output of prepare_mlp_params."""
    batch, seq, dim = x.shape
    assert dim == params["dim"], "feature dim mismatch with prepared params"
    w1, b1, w2, b2 = params["w1"], params["b1"], params["w2"], params["b2"]
    dim_p, hidden_p = w1.shape
    n = batch * seq
    out_dtype = x.dtype if out_dtype is None else out_dtype

    x2d = x.reshape(n, dim)
    if dim_p != dim:  # only pad when not already lane-aligned
        x2d = jnp.pad(x2d, ((0, 0), (0, dim_p - dim)))

    budget, vmem_limit = _vmem_budget()
    w_bytes = jnp.dtype(w1.dtype).itemsize
    x_bytes = jnp.dtype(x2d.dtype).itemsize
    o_bytes = jnp.dtype(out_dtype).itemsize

    def run(single_buffer_weights, weight_buffers):
        resident, tile_h, tile_n, grid = _plan(
            n, dim_p, hidden_p, x_bytes, o_bytes, w_bytes, budget, weight_buffers)
        return _mlp_pallas_call(
            x2d, w1, b1, w2, b2,
            out_dtype=out_dtype, resident=resident, tile_h=tile_h, tile_n=tile_n,
            grid=grid, vmem_limit=vmem_limit, gelu_approximate=gelu_approximate,
            single_buffer_weights=single_buffer_weights)

    try:
        out = run(single_buffer_weights=True, weight_buffers=1)
    except Exception:
        # pl.Buffered(1) unsupported or the aggressive plan exceeded VMEM:
        # retry with default double-buffering and conservative sizing.
        out = run(single_buffer_weights=False, weight_buffers=2)

    if dim_p != dim:  # slice only when padding was applied
        out = out[:, :dim]
    return out.reshape(batch, seq, dim)


def init_params(key, dim, hidden_dim, dtype=jnp.float32):
    # Mimic torch.nn.Linear default init: U(-1/sqrt(fan_in), 1/sqrt(fan_in)).
    k1, k2, k3, k4 = jax.random.split(key, 4)
    lim1 = 1.0 / math.sqrt(dim)
    lim2 = 1.0 / math.sqrt(hidden_dim)
    w1 = jax.random.uniform(k1, (dim, hidden_dim), dtype, -lim1, lim1)
    b1 = jax.random.uniform(k2, (hidden_dim,), dtype, -lim1, lim1)
    w2 = jax.random.uniform(k3, (hidden_dim, dim), dtype, -lim2, lim2)
    b2 = jax.random.uniform(k4, (dim,), dtype, -lim2, lim2)
    return w1, b1, w2, b2


def _reference(x, w1, b1, w2, b2):
    dim = x.shape[-1]
    h = x.reshape(-1, dim) @ w1 + b1
    h = 0.5 * h * (1.0 + lax.erf(h / jnp.sqrt(2.0)))   # exact GELU, dropout p=0
    return (h @ w2 + b2).reshape(x.shape)


if __name__ == "__main__":
    key = jax.random.PRNGKey(0)

    # Config 1: small, unaligned dims (exercise the pad/slice path).
    batch, seq, dim, hidden_dim = 2, 8, 32, 64
    kx, kp, kx2, kp2 = jax.random.split(key, 4)
    x = jax.random.normal(kx, (batch, seq, dim), jnp.float32)
    w1, b1, w2, b2 = init_params(kp, dim, hidden_dim)
    params = prepare_mlp_params(w1, b1, w2, b2)
    y = simple_mlp(x, params)
    jax.block_until_ready(y)
    y_ref = _reference(x, w1, b1, w2, b2)
    err = float(jnp.max(jnp.abs(y - y_ref)))
    assert y.shape == y_ref.shape and y.dtype == y_ref.dtype
    assert jnp.allclose(y, y_ref, atol=5e-2, rtol=5e-2), err

    # Config 2: lane-aligned dims with multiple row tiles and hidden chunks
    # (exercise the f32 accumulator / pl.when init-finalize path, no padding).
    batch2, seq2, dim2, hidden2 = 4, 64, 256, 2048
    x2 = jax.random.normal(kx2, (batch2, seq2, dim2), jnp.float32)
    w1b, b1b, w2b, b2b = init_params(kp2, dim2, hidden2)
    params2 = prepare_mlp_params(w1b, b1b, w2b, b2b)
    y2 = simple_mlp(x2, params2)
    jax.block_until_ready(y2)
    y2_ref = _reference(x2, w1b, b1b, w2b, b2b)
    err2 = float(jnp.max(jnp.abs(y2 - y2_ref)))
    assert jnp.allclose(y2, y2_ref, atol=5e-2, rtol=5e-2), err2

    print("KERNEL_OK")
</pallas_src>

<mosaic_0001>
module attributes {stable_mosaic.version = 11 : i64} {
  func.func @mlp_kernel(%arg0: i32, %arg1: i32, %arg2: memref<16x128xf32, #tpu.memory_space<vmem>>, %arg3: memref<128x128xbf16, #tpu.memory_space<vmem>>, %arg4: memref<1x128xf32, #tpu.memory_space<vmem>>, %arg5: memref<128x128xbf16, #tpu.memory_space<vmem>>, %arg6: memref<1x128xf32, #tpu.memory_space<vmem>>, %arg7: memref<16x128xf32, #tpu.memory_space<vmem>>, %arg8: memref<16x128xf32, #tpu.memory_space<vmem>>) attributes {dimension_semantics = [#tpu.dimension_semantics<parallel>, #tpu.dimension_semantics<arbitrary>], iteration_bounds = array<i64: 1, 1>, scalar_prefetch = 0 : i64, scratch_operands = 1 : i64, tpu.core_type = #tpu.core_type<tc>, window_params = [{transform_indices = @transform_0, window_bounds = array<i64: 16, 128>}, {pipeline_mode = #tpu.pipeline_mode<synchronous>, transform_indices = @transform_1, window_bounds = array<i64: 128, 128>}, {pipeline_mode = #tpu.pipeline_mode<synchronous>, transform_indices = @transform_2, window_bounds = array<i64: 1, 128>}, {pipeline_mode = #tpu.pipeline_mode<synchronous>, transform_indices = @transform_3, window_bounds = array<i64: 128, 128>}, {pipeline_mode = #tpu.pipeline_mode<synchronous>, transform_indices = @transform_4, window_bounds = array<i64: 1, 128>}, {transform_indices = @transform_5, window_bounds = array<i64: 16, 128>}]} {
    %c0_i32 = arith.constant 0 : i32
    %0 = arith.cmpi eq, %arg1, %c0_i32 : i32
    %1 = arith.extui %0 : i1 to i32
    %c0_i32_0 = arith.constant 0 : i32
    %2 = arith.cmpi ne, %1, %c0_i32_0 : i32
    scf.if %2 {
      %cst_15 = arith.constant 0.000000e+00 : f32
      %32 = vector.broadcast %cst_15 : f32 to vector<16x128xf32>
      %c0_16 = arith.constant 0 : index
      %c0_17 = arith.constant 0 : index
      %33 = vector.load %arg8[%c0_16, %c0_17] : memref<16x128xf32, #tpu.memory_space<vmem>>, vector<16x128xf32>
      tpu.vector_store %arg8[%c0_16, %c0_17], %32 {strides = array<i32>} : memref<16x128xf32, #tpu.memory_space<vmem>>, vector<16x128xf32>,
    } else {
    }
    %c0 = arith.constant 0 : index
    %c0_1 = arith.constant 0 : index
    %3 = vector.load %arg2[%c0, %c0_1] : memref<16x128xf32, #tpu.memory_space<vmem>>, vector<16x128xf32>
    %4 = arith.truncf %3 : vector<16x128xf32> to vector<16x128xbf16>
    %c128_i32 = arith.constant 128 : i32
    %5 = arith.muli %arg1, %c128_i32 : i32
    %6 = tpu.assume_multiple %5, 128 : i32
    %c0_2 = arith.constant 0 : index
    %7 = arith.index_cast %6 : i32 to index
    %8 = vector.load %arg3[%c0_2, %7] : memref<128x128xbf16, #tpu.memory_space<vmem>>, vector<128x128xbf16>
    %c0_3 = arith.constant 0 : index
    %9 = arith.index_cast %6 : i32 to index
    %10 = vector.load %arg4[%c0_3, %9] : memref<1x128xf32, #tpu.memory_space<vmem>>, vector<1x128xf32>
    %11 = arith.index_cast %6 : i32 to index
    %c0_4 = arith.constant 0 : index
    %12 = vector.load %arg5[%11, %c0_4] : memref<128x128xbf16, #tpu.memory_space<vmem>>, vector<128x128xbf16>
    %cst = arith.constant dense<0.000000e+00> : vector<16x128xf32>
    %13 = tpu.matmul %4, %8, %cst {dimension_numbers = #tpu.dot_dimension_numbers<[1], [0], [0], [1], [0, 0, 1, 1], [], []>} : vector<16x128xbf16>, vector<128x128xbf16>, vector<16x128xf32> -> vector<16x128xf32>
    %14 = vector.broadcast %10 : vector<1x128xf32> to vector<16x128xf32>
    %15 = arith.addf %13, %14 : vector<16x128xf32>
    %cst_5 = arith.constant 5.000000e-01 : f32
    %16 = vector.broadcast %cst_5 : f32 to vector<16x128xf32>
    %17 = arith.mulf %16, %15 : vector<16x128xf32>
    %cst_6 = arith.constant 0.707106769 : f32
    %18 = vector.broadcast %cst_6 : f32 to vector<16x128xf32>
    %19 = arith.mulf %15, %18 : vector<16x128xf32>
    %20 = math.erf %19 : vector<16x128xf32>
    %cst_7 = arith.constant 1.000000e+00 : f32
    %21 = vector.broadcast %cst_7 : f32 to vector<16x128xf32>
    %22 = arith.addf %21, %20 : vector<16x128xf32>
    %23 = arith.mulf %17, %22 : vector<16x128xf32>
    %c0_8 = arith.constant 0 : index
    %c0_9 = arith.constant 0 : index
    %24 = vector.load %arg8[%c0_8, %c0_9] : memref<16x128xf32, #tpu.memory_space<vmem>>, vector<16x128xf32>
    %25 = arith.truncf %23 : vector<16x128xf32> to vector<16x128xbf16>
    %cst_10 = arith.constant dense<0.000000e+00> : vector<16x128xf32>
    %26 = tpu.matmul %25, %12, %cst_10 {dimension_numbers = #tpu.dot_dimension_numbers<[1], [0], [0], [1], [0, 0, 1, 1], [], []>} : vector<16x128xbf16>, vector<128x128xbf16>, vector<16x128xf32> -> vector<16x128xf32>
    %27 = arith.addf %24, %26 : vector<16x128xf32>
    %c0_11 = arith.constant 0 : index
    %c0_12 = arith.constant 0 : index
    %28 = vector.load %arg8[%c0_11, %c0_12] : memref<16x128xf32, #tpu.memory_space<vmem>>, vector<16x128xf32>
    tpu.vector_store %arg8[%c0_11, %c0_12], %27 {strides = array<i32>} : memref<16x128xf32, #tpu.memory_space<vmem>>, vector<16x128xf32>,
    %c0_i32_13 = arith.constant 0 : i32
    %29 = arith.cmpi eq, %arg1, %c0_i32_13 : i32
    %30 = arith.extui %29 : i1 to i32
    %c0_i32_14 = arith.constant 0 : i32
    %31 = arith.cmpi ne, %30, %c0_i32_14 : i32
    scf.if %31 {
      %c0_15 = arith.constant 0 : index
      %c0_16 = arith.constant 0 : index
      %32 = vector.load %arg8[%c0_15, %c0_16] : memref<16x128xf32, #tpu.memory_space<vmem>>, vector<16x128xf32>
      %c0_17 = arith.constant 0 : index
      %c0_18 = arith.constant 0 : index
      %33 = vector.load %arg6[%c0_17, %c0_18] : memref<1x128xf32, #tpu.memory_space<vmem>>, vector<1x128xf32>
      %34 = vector.broadcast %33 : vector<1x128xf32> to vector<16x128xf32>
      %35 = arith.addf %32, %34 : vector<16x128xf32>
      %c0_19 = arith.constant 0 : index
      %c0_20 = arith.constant 0 : index
      %36 = vector.load %arg7[%c0_19, %c0_20] : memref<16x128xf32, #tpu.memory_space<vmem>>, vector<16x128xf32>
      tpu.vector_store %arg7[%c0_19, %c0_20], %35 {strides = array<i32>} : memref<16x128xf32, #tpu.memory_space<vmem>>, vector<16x128xf32>,
    } else {
    }
    return
  }
  func.func @transform_0(%arg0: i32, %arg1: i32) -> (i32, i32) {
    %c0_i32 = arith.constant 0 : i32
    %c0_i32_0 = arith.constant 0 : i32
    return %arg0, %c0_i32 : i32, i32
  }
  func.func @transform_1(%arg0: i32, %arg1: i32) -> (i32, i32) {
    %c0_i32 = arith.constant 0 : i32
    %c0_i32_0 = arith.constant 0 : i32
    %c0_i32_1 = arith.constant 0 : i32
    return %c0_i32, %c0_i32_0 : i32, i32
  }
  func.func @transform_2(%arg0: i32, %arg1: i32) -> (i32, i32) {
    %c0_i32 = arith.constant 0 : i32
    %c0_i32_0 = arith.constant 0 : i32
    %c0_i32_1 = arith.constant 0 : i32
    return %c0_i32, %c0_i32_0 : i32, i32
  }
  func.func @transform_3(%arg0: i32, %arg1: i32) -> (i32, i32) {
    %c0_i32 = arith.constant 0 : i32
    %c0_i32_0 = arith.constant 0 : i32
    %c0_i32_1 = arith.constant 0 : i32
    return %c0_i32, %c0_i32_0 : i32, i32
  }
  func.func @transform_4(%arg0: i32, %arg1: i32) -> (i32, i32) {
    %c0_i32 = arith.constant 0 : i32
    %c0_i32_0 = arith.constant 0 : i32
    %c0_i32_1 = arith.constant 0 : i32
    return %c0_i32, %c0_i32_0 : i32, i32
  }
  func.func @transform_5(%arg0: i32, %arg1: i32) -> (i32, i32) {
    %c0_i32 = arith.constant 0 : i32
    %c0_i32_0 = arith.constant 0 : i32
    return %arg0, %c0_i32 : i32, i32
  }
}

module attributes {stable_mosaic.version = 11 : i64} {
  func.func @mlp_kernel(%arg0: i32, %arg1: i32, %arg2: memref<16x128xf32, #tpu.memory_space<vmem>>, %arg3: memref<128x128xbf16, #tpu.memory_space<vmem>>, %arg4: memref<1x128xf32, #tpu.memory_space<vmem>>, %arg5: memref<128x128xbf16, #tpu.memory_space<vmem>>, %arg6: memref<1x128xf32, #tpu.memory_space<vmem>>, %arg7: memref<16x128xf32, #tpu.memory_space<vmem>>, %arg8: memref<16x128xf32, #tpu.memory_space<vmem>>) attributes {dimension_semantics = [#tpu.dimension_semantics<parallel>, #tpu.dimension_semantics<arbitrary>], iteration_bounds = array<i64: 1, 1>, scalar_prefetch = 0 : i64, scratch_operands = 1 : i64, tpu.core_type = #tpu.core_type<tc>, window_params = [{transform_indices = @transform_0, window_bounds = array<i64: 16, 128>}, {pipeline_mode = #tpu.pipeline_mode<synchronous>, transform_indices = @transform_1, window_bounds = array<i64: 128, 128>}, {pipeline_mode = #tpu.pipeline_mode<synchronous>, transform_indices = @transform_2, window_bounds = array<i64: 1, 128>}, {pipeline_mode = #tpu.pipeline_mode<synchronous>, transform_indices = @transform_3, window_bounds = array<i64: 128, 128>}, {pipeline_mode = #tpu.pipeline_mode<synchronous>, transform_indices = @transform_4, window_bounds = array<i64: 1, 128>}, {transform_indices = @transform_5, window_bounds = array<i64: 16, 128>}]} {
    %c0_i32 = arith.constant 0 : i32
    %0 = arith.cmpi eq, %arg1, %c0_i32 : i32
    %1 = arith.extui %0 : i1 to i32
    %c0_i32_0 = arith.constant 0 : i32
    %2 = arith.cmpi ne, %1, %c0_i32_0 : i32
    scf.if %2 {
      %cst_15 = arith.constant 0.000000e+00 : f32
      %32 = vector.broadcast %cst_15 : f32 to vector<16x128xf32>
      %c0_16 = arith.constant 0 : index
      %c0_17 = arith.constant 0 : index
      %33 = vector.load %arg8[%c0_16, %c0_17] : memref<16x128xf32, #tpu.memory_space<vmem>>, vector<16x128xf32>
      tpu.vector_store %arg8[%c0_16, %c0_17], %32 {strides = array<i32>} : memref<16x128xf32, #tpu.memory_space<vmem>>, vector<16x128xf32>,
    } else {
    }
    %c0 = arith.constant 0 : index
    %c0_1 = arith.constant 0 : index
    %3 = vector.load %arg2[%c0, %c0_1] : memref<16x128xf32, #tpu.memory_space<vmem>>, vector<16x128xf32>
    %4 = arith.truncf %3 : vector<16x128xf32> to vector<16x128xbf16>
    %c128_i32 = arith.constant 128 : i32
    %5 = arith.muli %arg1, %c128_i32 : i32
    %6 = tpu.assume_multiple %5, 128 : i32
    %c0_2 = arith.constant 0 : index
    %7 = arith.index_cast %6 : i32 to index
    %8 = vector.load %arg3[%c0_2, %7] : memref<128x128xbf16, #tpu.memory_space<vmem>>, vector<128x128xbf16>
    %c0_3 = arith.constant 0 : index
    %9 = arith.index_cast %6 : i32 to index
    %10 = vector.load %arg4[%c0_3, %9] : memref<1x128xf32, #tpu.memory_space<vmem>>, vector<1x128xf32>
    %11 = arith.index_cast %6 : i32 to index
    %c0_4 = arith.constant 0 : index
    %12 = vector.load %arg5[%11, %c0_4] : memref<128x128xbf16, #tpu.memory_space<vmem>>, vector<128x128xbf16>
    %cst = arith.constant dense<0.000000e+00> : vector<16x128xf32>
    %13 = tpu.matmul %4, %8, %cst {dimension_numbers = #tpu.dot_dimension_numbers<[1], [0], [0], [1], [0, 0, 1, 1], [], []>} : vector<16x128xbf16>, vector<128x128xbf16>, vector<16x128xf32> -> vector<16x128xf32>
    %14 = vector.broadcast %10 : vector<1x128xf32> to vector<16x128xf32>
    %15 = arith.addf %13, %14 : vector<16x128xf32>
    %cst_5 = arith.constant 5.000000e-01 : f32
    %16 = vector.broadcast %cst_5 : f32 to vector<16x128xf32>
    %17 = arith.mulf %16, %15 : vector<16x128xf32>
    %cst_6 = arith.constant 0.707106769 : f32
    %18 = vector.broadcast %cst_6 : f32 to vector<16x128xf32>
    %19 = arith.mulf %15, %18 : vector<16x128xf32>
    %20 = math.erf %19 : vector<16x128xf32>
    %cst_7 = arith.constant 1.000000e+00 : f32
    %21 = vector.broadcast %cst_7 : f32 to vector<16x128xf32>
    %22 = arith.addf %21, %20 : vector<16x128xf32>
    %23 = arith.mulf %17, %22 : vector<16x128xf32>
    %c0_8 = arith.constant 0 : index
    %c0_9 = arith.constant 0 : index
    %24 = vector.load %arg8[%c0_8, %c0_9] : memref<16x128xf32, #tpu.memory_space<vmem>>, vector<16x128xf32>
    %25 = arith.truncf %23 : vector<16x128xf32> to vector<16x128xbf16>
    %cst_10 = arith.constant dense<0.000000e+00> : vector<16x128xf32>
    %26 = tpu.matmul %25, %12, %cst_10 {dimension_numbers = #tpu.dot_dimension_numbers<[1], [0], [0], [1], [0, 0, 1, 1], [], []>} : vector<16x128xbf16>, vector<128x128xbf16>, vector<16x128xf32> -> vector<16x128xf32>
    %27 = arith.addf %24, %26 : vector<16x128xf32>
    %c0_11 = arith.constant 0 : index
    %c0_12 = arith.constant 0 : index
    %28 = vector.load %arg8[%c0_11, %c0_12] : memref<16x128xf32, #tpu.memory_space<vmem>>, vector<16x128xf32>
    tpu.vector_store %arg8[%c0_11, %c0_12], %27 {strides = array<i32>} : memref<16x128xf32, #tpu.memory_space<vmem>>, vector<16x128xf32>,
    %c0_i32_13 = arith.constant 0 : i32
    %29 = arith.cmpi eq, %arg1, %c0_i32_13 : i32
    %30 = arith.extui %29 : i1 to i32
    %c0_i32_14 = arith.constant 0 : i32
    %31 = arith.cmpi ne, %30, %c0_i32_14 : i32
    scf.if %31 {
      %c0_15 = arith.constant 0 : index
      %c0_16 = arith.constant 0 : index
      %32 = vector.load %arg8[%c0_15, %c0_16] : memref<16x128xf32, #tpu.memory_space<vmem>>, vector<16x128xf32>
      %c0_17 = arith.constant 0 : index
      %c0_18 = arith.constant 0 : index
      %33 = vector.load %arg6[%c0_17, %c0_18] : memref<1x128xf32, #tpu.memory_space<vmem>>, vector<1x128xf32>
      %34 = vector.broadcast %33 : vector<1x128xf32> to vector<16x128xf32>
      %35 = arith.addf %32, %34 : vector<16x128xf32>
      %c0_19 = arith.constant 0 : index
      %c0_20 = arith.constant 0 : index
      %36 = vector.load %arg7[%c0_19, %c0_20] : memref<16x128xf32, #tpu.memory_space<vmem>>, vector<16x128xf32>
      tpu.vector_store %arg7[%c0_19, %c0_20], %35 {strides = array<i32>} : memref<16x128xf32, #tpu.memory_space<vmem>>, vector<16x128xf32>,
    } else {
    }
    return
  }
  func.func @transform_0(%arg0: i32, %arg1: i32) -> (i32, i32) {
    %c0_i32 = arith.constant 0 : i32
    %c0_i32_0 = arith.constant 0 : i32
    return %arg0, %c0_i32 : i32, i32
  }
  func.func @transform_1(%arg0: i32, %arg1: i32) -> (i32, i32) {
    %c0_i32 = arith.constant 0 : i32
    %c0_i32_0 = arith.constant 0 : i32
    %c0_i32_1 = arith.constant 0 : i32
    return %c0_i32, %c0_i32_0 : i32, i32
  }
  func.func @transform_2(%arg0: i32, %arg1: i32) -> (i32, i32) {
    %c0_i32 = arith.constant 0 : i32
    %c0_i32_0 = arith.constant 0 : i32
    %c0_i32_1 = arith.constant 0 : i32
    return %c0_i32, %c0_i32_0 : i32, i32
  }
  func.func @transform_3(%arg0: i32, %arg1: i32) -> (i32, i32) {
    %c0_i32 = arith.constant 0 : i32
    %c0_i32_0 = arith.constant 0 : i32
    %c0_i32_1 = arith.constant 0 : i32
    return %c0_i32, %c0_i32_0 : i32, i32
  }
  func.func @transform_4(%arg0: i32, %arg1: i32) -> (i32, i32) {
    %c0_i32 = arith.constant 0 : i32
    %c0_i32_0 = arith.constant 0 : i32
    %c0_i32_1 = arith.constant 0 : i32
    return %c0_i32, %c0_i32_0 : i32, i32
  }
  func.func @transform_5(%arg0: i32, %arg1: i32) -> (i32, i32) {
    %c0_i32 = arith.constant 0 : i32
    %c0_i32_0 = arith.constant 0 : i32
    return %arg0, %c0_i32 : i32, i32
  }
}

</mosaic_0001>

<llo_original>
// kernel: tpu_custom_call.1
$region0: #{tpu_custom_call.1}
  #allocation0 [shape = 'u32[]', space=smem, size = 0x4, offset = 0x4, fixed_abs, tag = 'smem constant byte address 0x4 - core index']
  #allocation1 [shape = 'u32[144,128]{1,0:T(1,128)}', space=vmem, size = 0x12000, scoped, tag = 'internal scratch']
  #allocation2 [shape = 'f32[16,128]{1,0:T(8,128)}', space=vmem, size = 0x2000, scoped, tag = 'scratch operand']
  %s0 = inlined_call_operand.hbm [shape: f32[16,128], index: 0, kind: input, shape index: {}]
  %s1 = inlined_call_operand.hbm [shape: bf16[128,128], index: 1, kind: input, shape index: {}]
  %s2 = inlined_call_operand.vmem [shape: f32[1,128], index: 2, kind: input, shape index: {}]
  %s3 = inlined_call_operand.hbm [shape: bf16[128,128], index: 3, kind: input, shape index: {}]
  %s4 = inlined_call_operand.vmem [shape: f32[1,128], index: 4, kind: input, shape index: {}]
  %s5 = inlined_call_operand.hbm [shape: f32[16,128], index: 5, kind: output, shape index: {}]
  %s6 = sld [smem:[#allocation0]]
  $region50: #{tpu_custom_call.1} parent=0
    _
  %s8 = ssub.s32 1, %s6
  %s9 = scalar_select 0, %s8, %s6
  $region1: #{tpu_custom_call.1} parent=0
    #allocation3 [shape = 'u8[8192]{0}', space=vmem, size = 0x2000, scoped, tag = 'input window, operand 0, single buffered']
    #allocation4 [shape = 's32[1]{0}', space=sflag, size = 0x4, scoped, tag = 'scoped memory for tpu_custom_call.1']
    #allocation5 [shape = 's32[1]{0}', space=sflag, size = 0x4, scoped, tag = 'scoped memory for tpu_custom_call.1']
    #allocation6 [shape = 'u8[32768]{0}', space=vmem, size = 0x8000, scoped, tag = 'input window, operand 1, single buffered']
    #allocation7 [shape = 's32[1]{0}', space=sflag, size = 0x4, scoped, tag = 'scoped memory for tpu_custom_call.1']
    #allocation8 [shape = 'u8[32768]{0}', space=vmem, size = 0x8000, scoped, tag = 'input window, operand 3, single buffered']
    #allocation9 [shape = 'u8[8192]{0}', space=vmem, size = 0x2000, scoped, tag = 'output window, operand 0, single buffered']
    %10 = vsyncpa [#allocation4], 0
    %11 = vsyncpa [#allocation7], 0
    %12 = vsyncpa [#allocation5], 0
    // Predicated region
    $region2: #{tpu_custom_call.1} parent=1 // pred_check
      _
    $region3: #{tpu_custom_call.1} parent=1 // pred_check_branch
      %14 = sbr.rel (0) target = $region5
    $region4: #{tpu_custom_call.1} parent=1 // pred_region
      %s16 = ssub.s32 256, 256
      %17 = vsyncadd [#allocation4], %s16
      %s18 = sshll.u32 [#allocation3], 4
      %s19 = int_to_ptr.vmem [resolvable:$true] %s18
      %24 = dma.hbm_to_vmem [thread:$0]  %s0, 256, %s19, [#allocation4], 128, 128, 8
    $region5: #{tpu_custom_call.1} parent=1 // pred_fallthru
      _
    // Predicated region
    $region6: #{tpu_custom_call.1} parent=1 // pred_check
      _
    $region7: #{tpu_custom_call.1} parent=1 // pred_check_branch
      %26 = sbr.rel (0) target = $region9
    $region8: #{tpu_custom_call.1} parent=1 // pred_region
      %s28 = ssub.s32 1024, 1024
      %29 = vsyncadd [#allocation7], %s28
      %s30 = sshll.u32 [#allocation6], 4
      %s31 = int_to_ptr.vmem [resolvable:$true] %s30
      %36 = dma.hbm_to_vmem [thread:$0]  %s1, 1024, %s31, [#allocation7], 64, 64, 4
    $region9: #{tpu_custom_call.1} parent=1 // pred_fallthru
      _
    // Predicated region
    $region10: #{tpu_custom_call.1} parent=1 // pred_check
      _
    $region11: #{tpu_custom_call.1} parent=1 // pred_check_branch
      %38 = sbr.rel (0) target = $region13
    $region12: #{tpu_custom_call.1} parent=1 // pred_region
      _
    $region13: #{tpu_custom_call.1} parent=1 // pred_fallthru
      _
    // Predicated region
    $region14: #{tpu_custom_call.1} parent=1 // pred_check
      _
    $region15: #{tpu_custom_call.1} parent=1 // pred_check_branch
      %40 = sbr.rel (0) target = $region17
    $region16: #{tpu_custom_call.1} parent=1 // pred_region
      %s42 = ssub.s32 1024, 1024
      %43 = vsyncadd [#allocation7], %s42
      %s44 = sshll.u32 [#allocation8], 4
      %s45 = int_to_ptr.vmem [resolvable:$true] %s44
      %50 = dma.hbm_to_vmem [thread:$0]  %s3, 1024, %s45, [#allocation7], 64, 64, 4
    $region17: #{tpu_custom_call.1} parent=1 // pred_fallthru
      _
    // Predicated region
    $region18: #{tpu_custom_call.1} parent=1 // pred_check
      _
    $region19: #{tpu_custom_call.1} parent=1 // pred_check_branch
      %52 = sbr.rel (0) target = $region21
    $region20: #{tpu_custom_call.1} parent=1 // pred_region
      _
    $region21: #{tpu_custom_call.1} parent=1 // pred_fallthru
      _
    // Predicated region
    $region22: #{tpu_custom_call.1} parent=1 // pred_check
      _
    $region23: #{tpu_custom_call.1} parent=1 // pred_check_branch
      %54 = sbr.rel (0) target = $region25
    $region24: #{tpu_custom_call.1} parent=1 // pred_region
      %55 = dma.done [#allocation4], 256
    $region25: #{tpu_custom_call.1} parent=1 // pred_fallthru
      _
    // Predicated region
    $region26: #{tpu_custom_call.1} parent=1 // pred_check
      _
    $region27: #{tpu_custom_call.1} parent=1 // pred_check_branch
      %57 = sbr.rel (0) target = $region29
    $region28: #{tpu_custom_call.1} parent=1 // pred_region
      %58 = dma.done [#allocation7], 1024
    $region29: #{tpu_custom_call.1} parent=1 // pred_fallthru
      _
    // Predicated region
    $region30: #{tpu_custom_call.1} parent=1 // pred_check
      _
    $region31: #{tpu_custom_call.1} parent=1 // pred_check_branch
      %60 = sbr.rel (0) target = $region33
    $region32: #{tpu_custom_call.1} parent=1 // pred_region
      %61 = dma.done [#allocation7], 1024
    $region33: #{tpu_custom_call.1} parent=1 // pred_fallthru
      _
    %p63 = scmp.eq.s32.totalorder 0, 0
    // Predicated region
    $region34: #{tpu_custom_call.1} parent=1 // pred_check
      %p64 = pneg %p63
    $region35: #{tpu_custom_call.1} parent=1 // pred_check_branch
      %66 = sbr.rel (%p64) target = $region37
    $region36: #{tpu_custom_call.1} parent=1 // pred_region
      %67 = vst [vmem:[#allocation2] sm:$0xff] 0.0
      %68 = vst [vmem:[#allocation2 + $0x8] sm:$0xff] 0.0
    $region37: #{tpu_custom_call.1} parent=1 // pred_fallthru
      _
    %v69 = vld [vmem:[#allocation3] sm:$0xff]
    %v70 = vld [vmem:[#allocation3 + $0x8] sm:$0xff]
    %v71 = vpack.c.bf16 %v70, %v69
    %s72 = smul.u32 0, 128
    %s73 = sshra.s32 %s72, 7
    %s74 = sand.u32 %s72, 127
    %s75 = smul.addr %s73, 4
    %s76 = scalar_lea.vmem [#allocation6], %s75
    %v77 = vld [vmem:[%s76] sm:$0xf]
    %v78 = vld [vmem:[%s76 + $0x4] sm:$0xf]
    %v79 = vld [vmem:[%s76 + $0x8] sm:$0xf]
    %v80 = vld [vmem:[%s76 + $0xc] sm:$0xf]
    %v81 = vld [vmem:[%s76 + $0x10] sm:$0xf]
    %v82 = vld [vmem:[%s76 + $0x14] sm:$0xf]
    %v83 = vld [vmem:[%s76 + $0x18] sm:$0xf]
    %v84 = vld [vmem:[%s76 + $0x1c] sm:$0xf]
    %v85 = vld [vmem:[%s76 + $0x20] sm:$0xf]
    %v86 = vld [vmem:[%s76 + $0x24] sm:$0xf]
    %v87 = vld [vmem:[%s76 + $0x28] sm:$0xf]
    %v88 = vld [vmem:[%s76 + $0x2c] sm:$0xf]
    %v89 = vld [vmem:[%s76 + $0x30] sm:$0xf]
    %v90 = vld [vmem:[%s76 + $0x34] sm:$0xf]
    %v91 = vld [vmem:[%s76 + $0x38] sm:$0xf]
    %v92 = vld [vmem:[%s76 + $0x3c] sm:$0xf]
    %s93 = scalar_lea.vmem %s2, %s73
    %v94 = vld [vmem:[%s93] sm:$0x1]
    %s95 = sshra.s32 %s72, 3
    %s96 = sand.u32 %s72, 7
    %s97 = smul.addr %s95, 4
    %s98 = scalar_lea.vmem [#allocation8], %s97
    %v99 = vld [vmem:[%s98] sm:$0xf]
    %v100 = vld [vmem:[%s98 + $0x4] sm:$0xf]
    %v101 = vld [vmem:[%s98 + $0x8] sm:$0xf]
    %v102 = vld [vmem:[%s98 + $0xc] sm:$0xf]
    %v103 = vld [vmem:[%s98 + $0x10] sm:$0xf]
    %v104 = vld [vmem:[%s98 + $0x14] sm:$0xf]
    %v105 = vld [vmem:[%s98 + $0x18] sm:$0xf]
    %v106 = vld [vmem:[%s98 + $0x1c] sm:$0xf]
    %v107 = vld [vmem:[%s98 + $0x20] sm:$0xf]
    %v108 = vld [vmem:[%s98 + $0x24] sm:$0xf]
    %v109 = vld [vmem:[%s98 + $0x28] sm:$0xf]
    %v110 = vld [vmem:[%s98 + $0x2c] sm:$0xf]
    %v111 = vld [vmem:[%s98 + $0x30] sm:$0xf]
    %v112 = vld [vmem:[%s98 + $0x34] sm:$0xf]
    %v113 = vld [vmem:[%s98 + $0x38] sm:$0xf]
    %v114 = vld [vmem:[%s98 + $0x3c] sm:$0xf]
    %v116 = vlaneseq
    %v117 = vshrl.u32 %v116, 7
    %v118 = vsub.s32 0, %v117
    %v119 = vrot.slane %v94, %v118
    %v137 = vunpack.c.l.b16 %v77
    %v138 = vunpack.c.l.b16 %v78
    %v139 = vunpack.c.l.b16 %v79
    %v140 = vunpack.c.l.b16 %v80
    %v141 = vunpack.c.l.b16 %v81
    %v142 = vunpack.c.l.b16 %v82
    %v143 = vunpack.c.l.b16 %v83
    %v144 = vunpack.c.l.b16 %v84
    %v145 = vunpack.c.l.b16 %v85
    %v146 = vunpack.c.l.b16 %v86
    %v147 = vunpack.c.l.b16 %v87
    %v148 = vunpack.c.l.b16 %v88
    %v149 = vunpack.c.l.b16 %v89
    %v150 = vunpack.c.l.b16 %v90
    %v151 = vunpack.c.l.b16 %v91
    %v152 = vunpack.c.l.b16 %v92
    %v153 = vpack.c.b16 %v138, %v137
    %v154 = vpack.c.b16 %v140, %v139
    %v155 = vpack.c.b16 %v142, %v141
    %v156 = vpack.c.b16 %v144, %v143
    %v157 = vpack.c.b16 %v146, %v145
    %v158 = vpack.c.b16 %v148, %v147
    %v159 = vpack.c.b16 %v150, %v149
    %v160 = vpack.c.b16 %v152, %v151
    %169 = vmatprep.subr.bf16.mxu0 0
    %170 = vmatpush1.bf16.msra.mxu0 %v153
    %171 = vmatprep.subr.bf16.mxu0 0
    %172 = vmatpush1.bf16.msra.mxu0 %v154
    %173 = vmatprep.subr.bf16.mxu0 0
    %174 = vmatpush1.bf16.msra.mxu0 %v155
    %175 = vmatprep.subr.bf16.mxu0 0
    %176 = vmatpush1.bf16.msra.mxu0 %v156
    %177 = vmatprep.subr.bf16.mxu0 0
    %178 = vmatpush1.bf16.msra.mxu0 %v157
    %179 = vmatprep.subr.bf16.mxu0 0
    %180 = vmatpush1.bf16.msra.mxu0 %v158
    %181 = vmatprep.subr.bf16.mxu0 0
    %182 = vmatpush1.bf16.msra.mxu0 %v159
    %183 = vmatprep.subr.bf16.mxu0 0
    %184 = vmatpush1.bf16.msra.mxu0 %v160
    %185 = vmatprep.subr.bf16.mxu0 0
    %186 = vmatpush1.bf16.msra.mxu0 0
    %187 = vmatprep.subr.bf16.mxu0 0
    %188 = vmatpush1.bf16.msra.mxu0 0
    %189 = vmatprep.subr.bf16.mxu0 0
    %190 = vmatpush1.bf16.msra.mxu0 0
    %191 = vmatprep.subr.bf16.mxu0 0
    %192 = vmatpush1.bf16.msra.mxu0 0
    %193 = vmatprep.subr.bf16.mxu0 0
    %194 = vmatpush1.bf16.msra.mxu0 0
    %195 = vmatprep.subr.bf16.mxu0 0
    %196 = vmatpush1.bf16.msra.mxu0 0
    %197 = vmatprep.subr.bf16.mxu0 0
    %198 = vmatpush1.bf16.msra.mxu0 0
    %199 = vmatprep.subr.bf16.mxu0 0
    %200 = vmatpush1.bf16.msra.mxu0 0
    %201 = vmatprep.mubr.bf16.mxu0 0
    %202 = vmatmul.mubr.bf16.gmra.mrb[0].mxu0 %v71
    %v203 = vpop.f32.mrb[0].mxu0
    %v204 = vadd.f32 %v119, %v203
    %v205 = vpop.f32.mrb[0].mxu0
    %v206 = vpop.f32.mrb[0].mxu0
    %v207 = vadd.f32 %v119, %v206
    %v208 = vpop.f32.mrb[0].mxu0
    %209 = vdwg.mxu0
    %v210 = vmul.f32 %v204, 0.5
    %v211 = vmul.f32 %v207, 0.5
    %v212 = vmul.f32 %v204, 0.70710677
    %v213 = vmul.f32 %v207, 0.70710677
    %v214 = verf.f32.pop %v212
    %v215 = verf.f32.pop %v213
    %v216 = vadd.f32 %v214, 1.0
    %v217 = vadd.f32 %v215, 1.0
    %v218 = vmul.f32 %v210, %v216
    %v219 = vmul.f32 %v211, %v217
    %v220 = vld [vmem:[#allocation2] sm:$0xff]
    %v221 = vld [vmem:[#allocation2 + $0x8] sm:$0xff]
    %v222 = vpack.c.bf16 %v219, %v218
    %v239 = vunpack.c.l.b16 %v99
    %v240 = vunpack.c.l.b16 %v100
    %v241 = vunpack.c.l.b16 %v101
    %v242 = vunpack.c.l.b16 %v102
    %v243 = vunpack.c.l.b16 %v103
    %v244 = vunpack.c.l.b16 %v104
    %v245 = vunpack.c.l.b16 %v105
    %v246 = vunpack.c.l.b16 %v106
    %v247 = vunpack.c.l.b16 %v107
    %v248 = vunpack.c.l.b16 %v108
    %v249 = vunpack.c.l.b16 %v109
    %v250 = vunpack.c.l.b16 %v110
    %v251 = vunpack.c.l.b16 %v111
    %v252 = vunpack.c.l.b16 %v112
    %v253 = vunpack.c.l.b16 %v113
    %v254 = vunpack.c.l.b16 %v114
    %v255 = vpack.c.b16 %v240, %v239
    %v256 = vpack.c.b16 %v242, %v241
    %v257 = vpack.c.b16 %v244, %v243
    %v258 = vpack.c.b16 %v246, %v245
    %v259 = vpack.c.b16 %v248, %v247
    %v260 = vpack.c.b16 %v250, %v249
    %v261 = vpack.c.b16 %v252, %v251
    %v262 = vpack.c.b16 %v254, %v253
    %271 = vmatprep.subr.bf16.mxu0 0
    %272 = vmatpush1.bf16.msra.mxu0 %v255
    %273 = vmatprep.subr.bf16.mxu0 0
    %274 = vmatpush1.bf16.msra.mxu0 %v256
    %275 = vmatprep.subr.bf16.mxu0 0
    %276 = vmatpush1.bf16.msra.mxu0 %v257
    %277 = vmatprep.subr.bf16.mxu0 0
    %278 = vmatpush1.bf16.msra.mxu0 %v258
    %279 = vmatprep.subr.bf16.mxu0 0
    %280 = vmatpush1.bf16.msra.mxu0 %v259
    %281 = vmatprep.subr.bf16.mxu0 0
    %282 = vmatpush1.bf16.msra.mxu0 %v260
    %283 = vmatprep.subr.bf16.mxu0 0
    %284 = vmatpush1.bf16.msra.mxu0 %v261
    %285 = vmatprep.subr.bf16.mxu0 0
    %286 = vmatpush1.bf16.msra.mxu0 %v262
    %287 = vmatprep.subr.bf16.mxu0 0
    %288 = vmatpush1.bf16.msra.mxu0 0
    %289 = vmatprep.subr.bf16.mxu0 0
    %290 = vmatpush1.bf16.msra.mxu0 0
    %291 = vmatprep.subr.bf16.mxu0 0
    %292 = vmatpush1.bf16.msra.mxu0 0
    %293 = vmatprep.subr.bf16.mxu0 0
    %294 = vmatpush1.bf16.msra.mxu0 0
    %295 = vmatprep.subr.bf16.mxu0 0
    %296 = vmatpush1.bf16.msra.mxu0 0
    %297 = vmatprep.subr.bf16.mxu0 0
    %298 = vmatpush1.bf16.msra.mxu0 0
    %299 = vmatprep.subr.bf16.mxu0 0
    %300 = vmatpush1.bf16.msra.mxu0 0
    %301 = vmatprep.subr.bf16.mxu0 0
    %302 = vmatpush1.bf16.msra.mxu0 0
    %303 = vmatprep.mubr.bf16.mxu0 0
    %304 = vmatmul.mubr.bf16.gmra.mrb[0].mxu0 %v222
    %v305 = vpop.f32.mrb[0].mxu0
    %v306 = vadd.f32 0.0, %v305
    %v307 = vpop.f32.mrb[0].mxu0
    %v308 = vpop.f32.mrb[0].mxu0
    %v309 = vadd.f32 0.0, %v308
    %v310 = vpop.f32.mrb[0].mxu0
    %311 = vdwg.mxu0
    %v312 = vadd.f32 %v220, %v306
    %v313 = vadd.f32 %v221, %v309
    %314 = vst [vmem:[#allocation2] sm:$0xff] %v312
    %315 = vst [vmem:[#allocation2 + $0x8] sm:$0xff] %v313
    // Predicated region
    $region38: #{tpu_custom_call.1} parent=1 // pred_check
      %p316 = pneg %p63
    $region39: #{tpu_custom_call.1} parent=1 // pred_check_branch
      %318 = sbr.rel (%p316) target = $region41
    $region40: #{tpu_custom_call.1} parent=1 // pred_region
      %v319 = vld [vmem:[#allocation2] sm:$0xff]
      %v320 = vld [vmem:[#allocation2 + $0x8] sm:$0xff]
      %v321 = vld [vmem:[%s4] sm:$0x1]
      %v323 = vlaneseq
      %v324 = vshrl.u32 %v323, 7
      %v325 = vsub.s32 0, %v324
      %v326 = vrot.slane %v321, %v325
      %v328 = vadd.f32 %v319, %v326
      %v329 = vadd.f32 %v320, %v326
      %330 = vst [vmem:[#allocation9] sm:$0xff] %v328
      %331 = vst [vmem:[#allocation9 + $0x8] sm:$0xff] %v329
    $region41: #{tpu_custom_call.1} parent=1 // pred_fallthru
      _
    // Predicated region
    $region42: #{tpu_custom_call.1} parent=1 // pred_check
      _
    $region43: #{tpu_custom_call.1} parent=1 // pred_check_branch
      %333 = sbr.rel (0) target = $region45
    $region44: #{tpu_custom_call.1} parent=1 // pred_region
      %s335 = ssub.s32 256, 256
      %336 = vsyncadd [#allocation5], %s335
      %s337 = sshll.u32 [#allocation9], 4
      %s338 = int_to_ptr.vmem [resolvable:$true] %s337
      %343 = dma.vmem_to_hbm [thread:$0]  %s338, 256, %s5, [#allocation5], 128, 128, 8
    $region45: #{tpu_custom_call.1} parent=1 // pred_fallthru
      _
    // Predicated region
    $region46: #{tpu_custom_call.1} parent=1 // pred_check
      _
    $region47: #{tpu_custom_call.1} parent=1 // pred_check_branch
      %345 = sbr.rel (0) target = $region49
    $region48: #{tpu_custom_call.1} parent=1 // pred_region
      %346 = dma.done [#allocation5], 256
    $region49: #{tpu_custom_call.1} parent=1 // pred_fallthru
      _
    %347 = vsyncpa [#allocation4], 1
    %348 = vsyncpa [#allocation7], 1
    %349 = vsyncpa [#allocation5], 1

// kernel: tpu_custom_call.1
$region0: #{tpu_custom_call.1}
  #allocation0 [shape = 'u32[]', space=smem, size = 0x4, offset = 0x4, fixed_abs, tag = 'smem constant byte address 0x4 - core index']
  #allocation1 [shape = 'u32[144,128]{1,0:T(1,128)}', space=vmem, size = 0x12000, scoped, tag = 'internal scratch']
  #allocation2 [shape = 'f32[16,128]{1,0:T(8,128)}', space=vmem, size = 0x2000, scoped, tag = 'scratch operand']
  %s0 = inlined_call_operand.hbm [shape: f32[16,128], index: 0, kind: input, shape index: {}]
  %s1 = inlined_call_operand.hbm [shape: bf16[128,128], index: 1, kind: input, shape index: {}]
  %s2 = inlined_call_operand.vmem [shape: f32[1,128], index: 2, kind: input, shape index: {}]
  %s3 = inlined_call_operand.hbm [shape: bf16[128,128], index: 3, kind: input, shape index: {}]
  %s4 = inlined_call_operand.vmem [shape: f32[1,128], index: 4, kind: input, shape index: {}]
  %s5 = inlined_call_operand.hbm [shape: f32[16,128], index: 5, kind: output, shape index: {}]
  %s6 = sld [smem:[#allocation0]]
  $region50: #{tpu_custom_call.1} parent=0
    _
  %s8 = ssub.s32 1, %s6
  %s9 = scalar_select 0, %s8, %s6
  $region1: #{tpu_custom_call.1} parent=0
    #allocation3 [shape = 'u8[8192]{0}', space=vmem, size = 0x2000, scoped, tag = 'input window, operand 0, single buffered']
    #allocation4 [shape = 's32[1]{0}', space=sflag, size = 0x4, scoped, tag = 'scoped memory for tpu_custom_call.1']
    #allocation5 [shape = 's32[1]{0}', space=sflag, size = 0x4, scoped, tag = 'scoped memory for tpu_custom_call.1']
    #allocation6 [shape = 'u8[32768]{0}', space=vmem, size = 0x8000, scoped, tag = 'input window, operand 1, single buffered']
    #allocation7 [shape = 's32[1]{0}', space=sflag, size = 0x4, scoped, tag = 'scoped memory for tpu_custom_call.1']
    #allocation8 [shape = 'u8[32768]{0}', space=vmem, size = 0x8000, scoped, tag = 'input window, operand 3, single buffered']
    #allocation9 [shape = 'u8[8192]{0}', space=vmem, size = 0x2000, scoped, tag = 'output window, operand 0, single buffered']
    %10 = vsyncpa [#allocation4], 0
    %11 = vsyncpa [#allocation7], 0
    %12 = vsyncpa [#allocation5], 0
    // Predicated region
    $region2: #{tpu_custom_call.1} parent=1 // pred_check
      _
    $region3: #{tpu_custom_call.1} parent=1 // pred_check_branch
      %14 = sbr.rel (0) target = $region5
    $region4: #{tpu_custom_call.1} parent=1 // pred_region
      %s16 = ssub.s32 256, 256
      %17 = vsyncadd [#allocation4], %s16
      %s18 = sshll.u32 [#allocation3], 4
      %s19 = int_to_ptr.vmem [resolvable:$true] %s18
      %24 = dma.hbm_to_vmem [thread:$0]  %s0, 256, %s19, [#allocation4], 128, 128, 8
    $region5: #{tpu_custom_call.1} parent=1 // pred_fallthru
      _
    // Predicated region
    $region6: #{tpu_custom_call.1} parent=1 // pred_check
      _
    $region7: #{tpu_custom_call.1} parent=1 // pred_check_branch
      %26 = sbr.rel (0) target = $region9
    $region8: #{tpu_custom_call.1} parent=1 // pred_region
      %s28 = ssub.s32 1024, 1024
      %29 = vsyncadd [#allocation7], %s28
      %s30 = sshll.u32 [#allocation6], 4
      %s31 = int_to_ptr.vmem [resolvable:$true] %s30
      %36 = dma.hbm_to_vmem [thread:$0]  %s1, 1024, %s31, [#allocation7], 64, 64, 4
    $region9: #{tpu_custom_call.1} parent=1 // pred_fallthru
      _
    // Predicated region
    $region10: #{tpu_custom_call.1} parent=1 // pred_check
      _
    $region11: #{tpu_custom_call.1} parent=1 // pred_check_branch
      %38 = sbr.rel (0) target = $region13
    $region12: #{tpu_custom_call.1} parent=1 // pred_region
      _
    $region13: #{tpu_custom_call.1} parent=1 // pred_fallthru
      _
    // Predicated region
    $region14: #{tpu_custom_call.1} parent=1 // pred_check
      _
    $region15: #{tpu_custom_call.1} parent=1 // pred_check_branch
      %40 = sbr.rel (0) target = $region17
    $region16: #{tpu_custom_call.1} parent=1 // pred_region
      %s42 = ssub.s32 1024, 1024
      %43 = vsyncadd [#allocation7], %s42
      %s44 = sshll.u32 [#allocation8], 4
      %s45 = int_to_ptr.vmem [resolvable:$true] %s44
      %50 = dma.hbm_to_vmem [thread:$0]  %s3, 1024, %s45, [#allocation7], 64, 64, 4
    $region17: #{tpu_custom_call.1} parent=1 // pred_fallthru
      _
    // Predicated region
    $region18: #{tpu_custom_call.1} parent=1 // pred_check
      _
    $region19: #{tpu_custom_call.1} parent=1 // pred_check_branch
      %52 = sbr.rel (0) target = $region21
    $region20: #{tpu_custom_call.1} parent=1 // pred_region
      _
    $region21: #{tpu_custom_call.1} parent=1 // pred_fallthru
      _
    // Predicated region
    $region22: #{tpu_custom_call.1} parent=1 // pred_check
      _
    $region23: #{tpu_custom_call.1} parent=1 // pred_check_branch
      %54 = sbr.rel (0) target = $region25
    $region24: #{tpu_custom_call.1} parent=1 // pred_region
      %55 = dma.done [#allocation4], 256
    $region25: #{tpu_custom_call.1} parent=1 // pred_fallthru
      _
    // Predicated region
    $region26: #{tpu_custom_call.1} parent=1 // pred_check
      _
    $region27: #{tpu_custom_call.1} parent=1 // pred_check_branch
      %57 = sbr.rel (0) target = $region29
    $region28: #{tpu_custom_call.1} parent=1 // pred_region
      %58 = dma.done [#allocation7], 1024
    $region29: #{tpu_custom_call.1} parent=1 // pred_fallthru
      _
    // Predicated region
    $region30: #{tpu_custom_call.1} parent=1 // pred_check
      _
    $region31: #{tpu_custom_call.1} parent=1 // pred_check_branch
      %60 = sbr.rel (0) target = $region33
    $region32: #{tpu_custom_call.1} parent=1 // pred_region
      %61 = dma.done [#allocation7], 1024
    $region33: #{tpu_custom_call.1} parent=1 // pred_fallthru
      _
    %p63 = scmp.eq.s32.totalorder 0, 0
    // Predicated region
    $region34: #{tpu_custom_call.1} parent=1 // pred_check
      %p64 = pneg %p63
    $region35: #{tpu_custom_call.1} parent=1 // pred_check_branch
      %66 = sbr.rel (%p64) target = $region37
    $region36: #{tpu_custom_call.1} parent=1 // pred_region
      %67 = vst [vmem:[#allocation2] sm:$0xff] 0.0
      %68 = vst [vmem:[#allocation2 + $0x8] sm:$0xff] 0.0
    $region37: #{tpu_custom_call.1} parent=1 // pred_fallthru
      _
    %v69 = vld [vmem:[#allocation3] sm:$0xff]
    %v70 = vld [vmem:[#allocation3 + $0x8] sm:$0xff]
    %v71 = vpack.c.bf16 %v70, %v69
    %s72 = smul.u32 0, 128
    %s73 = sshra.s32 %s72, 7
    %s74 = sand.u32 %s72, 127
    %s75 = smul.addr %s73, 4
    %s76 = scalar_lea.vmem [#allocation6], %s75
    %v77 = vld [vmem:[%s76] sm:$0xf]
    %v78 = vld [vmem:[%s76 + $0x4] sm:$0xf]
    %v79 = vld [vmem:[%s76 + $0x8] sm:$0xf]
    %v80 = vld [vmem:[%s76 + $0xc] sm:$0xf]
    %v81 = vld [vmem:[%s76 + $0x10] sm:$0xf]
    %v82 = vld [vmem:[%s76 + $0x14] sm:$0xf]
    %v83 = vld [vmem:[%s76 + $0x18] sm:$0xf]
    %v84 = vld [vmem:[%s76 + $0x1c] sm:$0xf]
    %v85 = vld [vmem:[%s76 + $0x20] sm:$0xf]
    %v86 = vld [vmem:[%s76 + $0x24] sm:$0xf]
    %v87 = vld [vmem:[%s76 + $0x28] sm:$0xf]
    %v88 = vld [vmem:[%s76 + $0x2c] sm:$0xf]
    %v89 = vld [vmem:[%s76 + $0x30] sm:$0xf]
    %v90 = vld [vmem:[%s76 + $0x34] sm:$0xf]
    %v91 = vld [vmem:[%s76 + $0x38] sm:$0xf]
    %v92 = vld [vmem:[%s76 + $0x3c] sm:$0xf]
    %s93 = scalar_lea.vmem %s2, %s73
    %v94 = vld [vmem:[%s93] sm:$0x1]
    %s95 = sshra.s32 %s72, 3
    %s96 = sand.u32 %s72, 7
    %s97 = smul.addr %s95, 4
    %s98 = scalar_lea.vmem [#allocation8], %s97
    %v99 = vld [vmem:[%s98] sm:$0xf]
    %v100 = vld [vmem:[%s98 + $0x4] sm:$0xf]
    %v101 = vld [vmem:[%s98 + $0x8] sm:$0xf]
    %v102 = vld [vmem:[%s98 + $0xc] sm:$0xf]
    %v103 = vld [vmem:[%s98 + $0x10] sm:$0xf]
    %v104 = vld [vmem:[%s98 + $0x14] sm:$0xf]
    %v105 = vld [vmem:[%s98 + $0x18] sm:$0xf]
    %v106 = vld [vmem:[%s98 + $0x1c] sm:$0xf]
    %v107 = vld [vmem:[%s98 + $0x20] sm:$0xf]
    %v108 = vld [vmem:[%s98 + $0x24] sm:$0xf]
    %v109 = vld [vmem:[%s98 + $0x28] sm:$0xf]
    %v110 = vld [vmem:[%s98 + $0x2c] sm:$0xf]
    %v111 = vld [vmem:[%s98 + $0x30] sm:$0xf]
    %v112 = vld [vmem:[%s98 + $0x34] sm:$0xf]
    %v113 = vld [vmem:[%s98 + $0x38] sm:$0xf]
    %v114 = vld [vmem:[%s98 + $0x3c] sm:$0xf]
    %v116 = vlaneseq
    %v117 = vshrl.u32 %v116, 7
    %v118 = vsub.s32 0, %v117
    %v119 = vrot.slane %v94, %v118
    %v137 = vunpack.c.l.b16 %v77
    %v138 = vunpack.c.l.b16 %v78
    %v139 = vunpack.c.l.b16 %v79
    %v140 = vunpack.c.l.b16 %v80
    %v141 = vunpack.c.l.b16 %v81
    %v142 = vunpack.c.l.b16 %v82
    %v143 = vunpack.c.l.b16 %v83
    %v144 = vunpack.c.l.b16 %v84
    %v145 = vunpack.c.l.b16 %v85
    %v146 = vunpack.c.l.b16 %v86
    %v147 = vunpack.c.l.b16 %v87
    %v148 = vunpack.c.l.b16 %v88
    %v149 = vunpack.c.l.b16 %v89
    %v150 = vunpack.c.l.b16 %v90
    %v151 = vunpack.c.l.b16 %v91
    %v152 = vunpack.c.l.b16 %v92
    %v153 = vpack.c.b16 %v138, %v137
    %v154 = vpack.c.b16 %v140, %v139
    %v155 = vpack.c.b16 %v142, %v141
    %v156 = vpack.c.b16 %v144, %v143
    %v157 = vpack.c.b16 %v146, %v145
    %v158 = vpack.c.b16 %v148, %v147
    %v159 = vpack.c.b16 %v150, %v149
    %v160 = vpack.c.b16 %v152, %v151
    %169 = vmatprep.subr.bf16.mxu0 0
    %170 = vmatpush1.bf16.msra.mxu0 %v153
    %171 = vmatprep.subr.bf16.mxu0 0
    %172 = vmatpush1.bf16.msra.mxu0 %v154
    %173 = vmatprep.subr.bf16.mxu0 0
    %174 = vmatpush1.bf16.msra.mxu0 %v155
    %175 = vmatprep.subr.bf16.mxu0 0
    %176 = vmatpush1.bf16.msra.mxu0 %v156
    %177 = vmatprep.subr.bf16.mxu0 0
    %178 = vmatpush1.bf16.msra.mxu0 %v157
    %179 = vmatprep.subr.bf16.mxu0 0
    %180 = vmatpush1.bf16.msra.mxu0 %v158
    %181 = vmatprep.subr.bf16.mxu0 0
    %182 = vmatpush1.bf16.msra.mxu0 %v159
    %183 = vmatprep.subr.bf16.mxu0 0
    %184 = vmatpush1.bf16.msra.mxu0 %v160
    %185 = vmatprep.subr.bf16.mxu0 0
    %186 = vmatpush1.bf16.msra.mxu0 0
    %187 = vmatprep.subr.bf16.mxu0 0
    %188 = vmatpush1.bf16.msra.mxu0 0
    %189 = vmatprep.subr.bf16.mxu0 0
    %190 = vmatpush1.bf16.msra.mxu0 0
    %191 = vmatprep.subr.bf16.mxu0 0
    %192 = vmatpush1.bf16.msra.mxu0 0
    %193 = vmatprep.subr.bf16.mxu0 0
    %194 = vmatpush1.bf16.msra.mxu0 0
    %195 = vmatprep.subr.bf16.mxu0 0
    %196 = vmatpush1.bf16.msra.mxu0 0
    %197 = vmatprep.subr.bf16.mxu0 0
    %198 = vmatpush1.bf16.msra.mxu0 0
    %199 = vmatprep.subr.bf16.mxu0 0
    %200 = vmatpush1.bf16.msra.mxu0 0
    %201 = vmatprep.mubr.bf16.mxu0 0
    %202 = vmatmul.mubr.bf16.gmra.mrb[0].mxu0 %v71
    %v203 = vpop.f32.mrb[0].mxu0
    %v204 = vadd.f32 %v119, %v203
    %v205 = vpop.f32.mrb[0].mxu0
    %v206 = vpop.f32.mrb[0].mxu0
    %v207 = vadd.f32 %v119, %v206
    %v208 = vpop.f32.mrb[0].mxu0
    %209 = vdwg.mxu0
    %v210 = vmul.f32 %v204, 0.5
    %v211 = vmul.f32 %v207, 0.5
    %v212 = vmul.f32 %v204, 0.70710677
    %v213 = vmul.f32 %v207, 0.70710677
    %v214 = verf.f32.pop %v212
    %v215 = verf.f32.pop %v213
    %v216 = vadd.f32 %v214, 1.0
    %v217 = vadd.f32 %v215, 1.0
    %v218 = vmul.f32 %v210, %v216
    %v219 = vmul.f32 %v211, %v217
    %v220 = vld [vmem:[#allocation2] sm:$0xff]
    %v221 = vld [vmem:[#allocation2 + $0x8] sm:$0xff]
    %v222 = vpack.c.bf16 %v219, %v218
    %v239 = vunpack.c.l.b16 %v99
    %v240 = vunpack.c.l.b16 %v100
    %v241 = vunpack.c.l.b16 %v101
    %v242 = vunpack.c.l.b16 %v102
    %v243 = vunpack.c.l.b16 %v103
    %v244 = vunpack.c.l.b16 %v104
    %v245 = vunpack.c.l.b16 %v105
    %v246 = vunpack.c.l.b16 %v106
    %v247 = vunpack.c.l.b16 %v107
    %v248 = vunpack.c.l.b16 %v108
    %v249 = vunpack.c.l.b16 %v109
    %v250 = vunpack.c.l.b16 %v110
    %v251 = vunpack.c.l.b16 %v111
    %v252 = vunpack.c.l.b16 %v112
    %v253 = vunpack.c.l.b16 %v113
    %v254 = vunpack.c.l.b16 %v114
    %v255 = vpack.c.b16 %v240, %v239
    %v256 = vpack.c.b16 %v242, %v241
    %v257 = vpack.c.b16 %v244, %v243
    %v258 = vpack.c.b16 %v246, %v245
    %v259 = vpack.c.b16 %v248, %v247
    %v260 = vpack.c.b16 %v250, %v249
    %v261 = vpack.c.b16 %v252, %v251
    %v262 = vpack.c.b16 %v254, %v253
    %271 = vmatprep.subr.bf16.mxu0 0
    %272 = vmatpush1.bf16.msra.mxu0 %v255
    %273 = vmatprep.subr.bf16.mxu0 0
    %274 = vmatpush1.bf16.msra.mxu0 %v256
    %275 = vmatprep.subr.bf16.mxu0 0
    %276 = vmatpush1.bf16.msra.mxu0 %v257
    %277 = vmatprep.subr.bf16.mxu0 0
    %278 = vmatpush1.bf16.msra.mxu0 %v258
    %279 = vmatprep.subr.bf16.mxu0 0
    %280 = vmatpush1.bf16.msra.mxu0 %v259
    %281 = vmatprep.subr.bf16.mxu0 0
    %282 = vmatpush1.bf16.msra.mxu0 %v260
    %283 = vmatprep.subr.bf16.mxu0 0
    %284 = vmatpush1.bf16.msra.mxu0 %v261
    %285 = vmatprep.subr.bf16.mxu0 0
    %286 = vmatpush1.bf16.msra.mxu0 %v262
    %287 = vmatprep.subr.bf16.mxu0 0
    %288 = vmatpush1.bf16.msra.mxu0 0
    %289 = vmatprep.subr.bf16.mxu0 0
    %290 = vmatpush1.bf16.msra.mxu0 0
    %291 = vmatprep.subr.bf16.mxu0 0
    %292 = vmatpush1.bf16.msra.mxu0 0
    %293 = vmatprep.subr.bf16.mxu0 0
    %294 = vmatpush1.bf16.msra.mxu0 0
    %295 = vmatprep.subr.bf16.mxu0 0
    %296 = vmatpush1.bf16.msra.mxu0 0
    %297 = vmatprep.subr.bf16.mxu0 0
    %298 = vmatpush1.bf16.msra.mxu0 0
    %299 = vmatprep.subr.bf16.mxu0 0
    %300 = vmatpush1.bf16.msra.mxu0 0
    %301 = vmatprep.subr.bf16.mxu0 0
    %302 = vmatpush1.bf16.msra.mxu0 0
    %303 = vmatprep.mubr.bf16.mxu0 0
    %304 = vmatmul.mubr.bf16.gmra.mrb[0].mxu0 %v222
    %v305 = vpop.f32.mrb[0].mxu0
    %v306 = vadd.f32 0.0, %v305
    %v307 = vpop.f32.mrb[0].mxu0
    %v308 = vpop.f32.mrb[0].mxu0
    %v309 = vadd.f32 0.0, %v308
    %v310 = vpop.f32.mrb[0].mxu0
    %311 = vdwg.mxu0
    %v312 = vadd.f32 %v220, %v306
    %v313 = vadd.f32 %v221, %v309
    %314 = vst [vmem:[#allocation2] sm:$0xff] %v312
    %315 = vst [vmem:[#allocation2 + $0x8] sm:$0xff] %v313
    // Predicated region
    $region38: #{tpu_custom_call.1} parent=1 // pred_check
      %p316 = pneg %p63
    $region39: #{tpu_custom_call.1} parent=1 // pred_check_branch
      %318 = sbr.rel (%p316) target = $region41
    $region40: #{tpu_custom_call.1} parent=1 // pred_region
      %v319 = vld [vmem:[#allocation2] sm:$0xff]
      %v320 = vld [vmem:[#allocation2 + $0x8] sm:$0xff]
      %v321 = vld [vmem:[%s4] sm:$0x1]
      %v323 = vlaneseq
      %v324 = vshrl.u32 %v323, 7
      %v325 = vsub.s32 0, %v324
      %v326 = vrot.slane %v321, %v325
      %v328 = vadd.f32 %v319, %v326
      %v329 = vadd.f32 %v320, %v326
      %330 = vst [vmem:[#allocation9] sm:$0xff] %v328
      %331 = vst [vmem:[#allocation9 + $0x8] sm:$0xff] %v329
    $region41: #{tpu_custom_call.1} parent=1 // pred_fallthru
      _
    // Predicated region
    $region42: #{tpu_custom_call.1} parent=1 // pred_check
      _
    $region43: #{tpu_custom_call.1} parent=1 // pred_check_branch
      %333 = sbr.rel (0) target = $region45
    $region44: #{tpu_custom_call.1} parent=1 // pred_region
      %s335 = ssub.s32 256, 256
      %336 = vsyncadd [#allocation5], %s335
      %s337 = sshll.u32 [#allocation9], 4
      %s338 = int_to_ptr.vmem [resolvable:$true] %s337
      %343 = dma.vmem_to_hbm [thread:$0]  %s338, 256, %s5, [#allocation5], 128, 128, 8
    $region45: #{tpu_custom_call.1} parent=1 // pred_fallthru
      _
    // Predicated region
    $region46: #{tpu_custom_call.1} parent=1 // pred_check
      _
    $region47: #{tpu_custom_call.1} parent=1 // pred_check_branch
      %345 = sbr.rel (0) target = $region49
    $region48: #{tpu_custom_call.1} parent=1 // pred_region
      %346 = dma.done [#allocation5], 256
    $region49: #{tpu_custom_call.1} parent=1 // pred_fallthru
      _
    %347 = vsyncpa [#allocation4], 1
    %348 = vsyncpa [#allocation7], 1
    %349 = vsyncpa [#allocation5], 1

</llo_original>
